<compile_context>
chip_gen: v7x
topology: tpu7x:2x2x1
jax: 0.10.0
libtpu: 0.0.40
codegen_flags: <defaults>
</compile_context>

<pallas_src>
import functools

import jax
import jax.numpy as jnp
from jax.experimental import pallas as pl
from jax.experimental.pallas import tpu as pltpu

LN_EPS = 1e-5  # torch.nn.LayerNorm default


def _round_up(x, m):
    return ((x + m - 1) // m) * m


def _choose_row_tile(rows, requested):
    rt = min(int(requested), _round_up(rows, 8))
    if rows > 8:
        # Leave at least 2 grid steps so v7x's two TensorCores both get work.
        rt = min(rt, _round_up((rows + 1) // 2, 8))
    return max(rt, 8)


def _transition_kernel(x_ref, gamma_ref, beta_ref, w1_ref, b1_ref, w2_ref,
                       b2_ref, o_ref, *, i_chunk, use_bf16_matmul):
    # x_ref: (TM, C) tile of rows; params are full (untiled) blocks.

    # --- LayerNorm over last dim (stats in f32) ---
    x = x_ref[...].astype(jnp.float32)
    mean = jnp.mean(x, axis=-1, keepdims=True)
    centered = x - mean
    var = jnp.mean(centered * centered, axis=-1, keepdims=True)
    xn = centered * jax.lax.rsqrt(var + LN_EPS)
    xn = xn * gamma_ref[...].astype(jnp.float32) + beta_ref[...].astype(jnp.float32)

    # MXU operand dtype: weights' native dtype, or bf16 when weights are f32 and the
    # fast path is enabled. Accumulation is always f32 via preferred_element_type.
    w_dtype = w1_ref.dtype
    if use_bf16_matmul and w_dtype == jnp.float32:
        mm_dtype = jnp.bfloat16
    else:
        mm_dtype = w_dtype
    xn_mm = xn.astype(mm_dtype)

    num_i = w1_ref.shape[1]
    acc = None
    # Static chunk loop over the intermediate dimension: bounds the (TM, I) f32
    # intermediate to (TM, i_chunk) so large row tiles fit v7x VMEM.
    for start in range(0, num_i, i_chunk):
        end = min(start + i_chunk, num_i)
        w1c = w1_ref[:, start:end].astype(mm_dtype)
        b1c = b1_ref[:, start:end].astype(jnp.float32)
        h = jnp.dot(xn_mm, w1c, preferred_element_type=jnp.float32)
        h = jnp.maximum(h + b1c, 0.0)
        w2c = w2_ref[start:end, :].astype(mm_dtype)
        part = jnp.dot(h.astype(mm_dtype), w2c, preferred_element_type=jnp.float32)
        acc = part if acc is None else acc + part

    out = acc + b2_ref[...].astype(jnp.float32)
    o_ref[...] = out.astype(o_ref.dtype)


def _vmem_estimate(row_tile, c, i, i_chunk, act_dtype, w_dtype, use_bf16_matmul):
    act_b = jnp.dtype(act_dtype).itemsize
    w_b = jnp.dtype(w_dtype).itemsize
    mm_b = 2 if (use_bf16_matmul and w_b == 4) else w_b
    # x and out tiles, double-buffered.
    io = 2 * (row_tile * c * act_b) * 2
    # Parameter blocks (gamma, beta, w1, b1, w2, b2), default double-buffered.
    params = (c * i + i + i * c + 3 * c) * w_b * 2
    # In-kernel temporaries: xn (f32 + mm copy), h chunk (f32 + mm copy), f32 acc.
    tmp = (row_tile * c * (4 + mm_b)
           + row_tile * min(i_chunk, i) * (4 + mm_b)
           + row_tile * c * 4)
    return io + params + tmp


def transition_opt(act, mask, params, *, row_tile=2048, i_chunk=512,
                   use_bf16_matmul=True, vmem_limit_bytes=None):
    """Pallas implementation of TransitionOpt.forward.

    act:  [N_seq, N_res, C]   (f32 or bf16)
    mask: [N_seq, N_res]      (unused by the reference forward -- kept for parity)
    params: dict with ln_gamma (C,), ln_beta (C,), w1 (C,I), b1 (I,), w2 (I,C), b2 (C,)
    """
    del mask  # mask.unsqueeze(-1) in the reference is never applied to `act`.
    n_seq, n_res, c = act.shape
    i = params["w1"].shape[1]
    rows = n_seq * n_res

    x2d = act.reshape(rows, c)

    rt = _choose_row_tile(rows, row_tile)
    grid = (pl.cdiv(rows, rt),)

    # Intermediate-dim chunk: full I if small, otherwise a multiple of 128.
    if i <= i_chunk:
        i_chunk_eff = i
    else:
        i_chunk_eff = max(128, (int(i_chunk) // 128) * 128)

    # Keep 1-D params as (1, dim) so they tile cleanly on TPU.
    gamma = params["ln_gamma"].reshape(1, c)
    beta = params["ln_beta"].reshape(1, c)
    w1 = params["w1"]                 # (C, I)
    b1 = params["b1"].reshape(1, i)
    w2 = params["w2"]                 # (I, C)
    b2 = params["b2"].reshape(1, c)

    if vmem_limit_bytes is None:
        est = _vmem_estimate(rt, c, i, i_chunk_eff, act.dtype, w1.dtype,
                             use_bf16_matmul)
        vmem_limit_bytes = int(min(max(est + 16 * 1024 * 1024, 32 * 1024 * 1024),
                                   64 * 1024 * 1024))

    act_bytes = jnp.dtype(act.dtype).itemsize
    w_bytes = jnp.dtype(w1.dtype).itemsize
    cost = pl.CostEstimate(
        flops=4 * rows * c * i,
        transcendentals=rows,
        bytes_accessed=rows * c * 2 * act_bytes + (2 * c * i + i + 3 * c) * w_bytes,
    )

    kernel = functools.partial(_transition_kernel, i_chunk=i_chunk_eff,
                               use_bf16_matmul=use_bf16_matmul)
    full = lambda shape: pl.BlockSpec(shape, lambda r: (0, 0))

    out2d = pl.pallas_call(
        kernel,
        out_shape=jax.ShapeDtypeStruct((rows, c), act.dtype),
        grid_spec=pltpu.PrefetchScalarGridSpec(
            num_scalar_prefetch=0,
            grid=grid,
            in_specs=[
                pl.BlockSpec((rt, c), lambda r: (r, 0)),  # x tile (ragged last block ok)
                full((1, c)),    # ln gamma
                full((1, c)),    # ln beta
                full((c, i)),    # w1
                full((1, i)),    # b1
                full((i, c)),    # w2
                full((1, c)),    # b2
            ],
            out_specs=pl.BlockSpec((rt, c), lambda r: (r, 0)),
        ),
        compiler_params=pltpu.CompilerParams(
            dimension_semantics=("parallel",),
            vmem_limit_bytes=vmem_limit_bytes,
        ),
        cost_estimate=cost,
    )(x2d, gamma, beta, w1, b1, w2, b2)

    return out2d.reshape(n_seq, n_res, c)


def _reference(act, params):
    x = act.astype(jnp.float32)
    mean = jnp.mean(x, axis=-1, keepdims=True)
    var = jnp.mean((x - mean) ** 2, axis=-1, keepdims=True)
    xn = (x - mean) * jax.lax.rsqrt(var + LN_EPS)
    xn = xn * params["ln_gamma"] + params["ln_beta"]
    hp = jax.lax.Precision.HIGHEST
    h = jnp.maximum(jnp.dot(xn, params["w1"], precision=hp) + params["b1"], 0.0)
    out = jnp.dot(h, params["w2"], precision=hp) + params["b2"]
    return out


def _init_params(key, num_channel, factor):
    num_intermediate = int(num_channel * factor)
    k = jax.random.split(key, 6)
    return {
        "ln_gamma": jnp.ones((num_channel,), jnp.float32)
                    + 0.01 * jax.random.normal(k[0], (num_channel,)),
        "ln_beta": 0.01 * jax.random.normal(k[1], (num_channel,)),
        # stored as (in, out) == nn.Linear.weight.T
        "w1": jax.random.normal(k[2], (num_channel, num_intermediate))
              / jnp.sqrt(num_channel).astype(jnp.float32),
        "b1": 0.01 * jax.random.normal(k[3], (num_intermediate,)),
        "w2": jax.random.normal(k[4], (num_intermediate, num_channel))
              / jnp.sqrt(num_intermediate).astype(jnp.float32),
        "b2": 0.01 * jax.random.normal(k[5], (num_channel,)),
    }


if __name__ == "__main__":
    key = jax.random.PRNGKey(0)
    k_act, k_mask, k_par = jax.random.split(key, 3)

    # Small but lane-dense shapes: C = 128 (AlphaFold pair channel), I = 512.
    N_SEQ, N_RES, C = 8, 16, 128
    FACTOR = 4

    act = jax.random.normal(k_act, (N_SEQ, N_RES, C), dtype=jnp.float32)
    mask = (jax.random.uniform(k_mask, (N_SEQ, N_RES)) > 0.1).astype(jnp.float32)
    params = _init_params(k_par, C, FACTOR)
    ref = _reference(act, params)

    # 1) f32 MXU path -- tight tolerance vs. the f32 HIGHEST reference.
    out_f32 = jax.block_until_ready(
        transition_opt(act, mask, params, use_bf16_matmul=False))
    assert out_f32.shape == act.shape
    assert jnp.allclose(out_f32, ref.astype(act.dtype), atol=1e-3, rtol=1e-3), \
        "f32 path mismatch vs reference"

    # 2) Default fast path: bf16 MXU operands, f32 accumulation.
    out_bf = jax.block_until_ready(transition_opt(act, mask, params))
    assert jnp.allclose(out_bf, ref.astype(act.dtype), atol=5e-2, rtol=5e-2), \
        "bf16-matmul path mismatch vs reference"

    # 3) Ragged row count (rows = 65): exercises the OOB-masked last block
    #    (no wrapper-side pad / slice).
    act2 = jax.random.normal(k_act, (5, 13, C), dtype=jnp.float32)
    mask2 = jnp.ones((5, 13), jnp.float32)
    ref2 = _reference(act2, params)
    out2 = jax.block_until_ready(
        transition_opt(act2, mask2, params, use_bf16_matmul=False))
    assert out2.shape == act2.shape
    assert jnp.allclose(out2, ref2.astype(act2.dtype), atol=1e-3, rtol=1e-3), \
        "ragged-rows path mismatch vs reference"

    # 4) bf16 activations (halves HBM traffic on v6e/v7x); LN stats stay f32 in-kernel.
    act_bf16 = act.astype(jnp.bfloat16)
    out_bf16 = jax.block_until_ready(transition_opt(act_bf16, mask, params))
    assert out_bf16.dtype == jnp.bfloat16
    assert jnp.allclose(out_bf16.astype(jnp.float32), ref, atol=1e-1, rtol=1e-1), \
        "bf16-activation path mismatch vs reference"

    print("KERNEL_OK")
</pallas_src>

<mosaic_0001>
module attributes {stable_mosaic.version = 11 : i64} {
  func.func @_transition_kernel(%arg0: i32, %arg1: memref<64x128xf32, #tpu.memory_space<vmem>>, %arg2: memref<1x128xf32, #tpu.memory_space<vmem>>, %arg3: memref<1x128xf32, #tpu.memory_space<vmem>>, %arg4: memref<128x512xf32, #tpu.memory_space<vmem>>, %arg5: memref<1x512xf32, #tpu.memory_space<vmem>>, %arg6: memref<512x128xf32, #tpu.memory_space<vmem>>, %arg7: memref<1x128xf32, #tpu.memory_space<vmem>>, %arg8: memref<64x128xf32, #tpu.memory_space<vmem>>) attributes {dimension_semantics = [#tpu.dimension_semantics<parallel>], iteration_bounds = array<i64: 2>, scalar_prefetch = 0 : i64, scratch_operands = 0 : i64, tpu.core_type = #tpu.core_type<tc>, window_params = [{transform_indices = @transform_0, window_bounds = array<i64: 64, 128>}, {pipeline_mode = #tpu.pipeline_mode<synchronous>, transform_indices = @transform_1, window_bounds = array<i64: 1, 128>}, {pipeline_mode = #tpu.pipeline_mode<synchronous>, transform_indices = @transform_2, window_bounds = array<i64: 1, 128>}, {pipeline_mode = #tpu.pipeline_mode<synchronous>, transform_indices = @transform_3, window_bounds = array<i64: 128, 512>}, {pipeline_mode = #tpu.pipeline_mode<synchronous>, transform_indices = @transform_4, window_bounds = array<i64: 1, 512>}, {pipeline_mode = #tpu.pipeline_mode<synchronous>, transform_indices = @transform_5, window_bounds = array<i64: 512, 128>}, {pipeline_mode = #tpu.pipeline_mode<synchronous>, transform_indices = @transform_6, window_bounds = array<i64: 1, 128>}, {transform_indices = @transform_7, window_bounds = array<i64: 64, 128>}]} {
    %c0 = arith.constant 0 : index
    %c0_0 = arith.constant 0 : index
    %0 = vector.load %arg1[%c0, %c0_0] : memref<64x128xf32, #tpu.memory_space<vmem>>, vector<64x128xf32>
    %cst = arith.constant dense<0.000000e+00> : vector<64xf32>
    %1 = vector.multi_reduction <add>, %0, %cst [1] : vector<64x128xf32> to vector<64xf32>
    %2 = vector.shape_cast %1 : vector<64xf32> to vector<64x1xf32>
    %cst_1 = arith.constant 1.280000e+02 : f32
    %3 = vector.broadcast %cst_1 : f32 to vector<64x1xf32>
    %4 = arith.divf %2, %3 : vector<64x1xf32>
    %5 = vector.broadcast %4 : vector<64x1xf32> to vector<64x128xf32>
    %6 = arith.subf %0, %5 : vector<64x128xf32>
    %7 = arith.mulf %6, %6 : vector<64x128xf32>
    %cst_2 = arith.constant dense<0.000000e+00> : vector<64xf32>
    %8 = vector.multi_reduction <add>, %7, %cst_2 [1] : vector<64x128xf32> to vector<64xf32>
    %9 = vector.shape_cast %8 : vector<64xf32> to vector<64x1xf32>
    %cst_3 = arith.constant 1.280000e+02 : f32
    %10 = vector.broadcast %cst_3 : f32 to vector<64x1xf32>
    %11 = arith.divf %9, %10 : vector<64x1xf32>
    %cst_4 = arith.constant 9.99999974E-6 : f32
    %12 = vector.broadcast %cst_4 : f32 to vector<64x1xf32>
    %13 = arith.addf %11, %12 : vector<64x1xf32>
    %14 = math.rsqrt %13 : vector<64x1xf32>
    %15 = vector.broadcast %14 : vector<64x1xf32> to vector<64x128xf32>
    %16 = arith.mulf %6, %15 : vector<64x128xf32>
    %c0_5 = arith.constant 0 : index
    %c0_6 = arith.constant 0 : index
    %17 = vector.load %arg2[%c0_5, %c0_6] : memref<1x128xf32, #tpu.memory_space<vmem>>, vector<1x128xf32>
    %18 = vector.broadcast %17 : vector<1x128xf32> to vector<64x128xf32>
    %19 = arith.mulf %16, %18 : vector<64x128xf32>
    %c0_7 = arith.constant 0 : index
    %c0_8 = arith.constant 0 : index
    %20 = vector.load %arg3[%c0_7, %c0_8] : memref<1x128xf32, #tpu.memory_space<vmem>>, vector<1x128xf32>
    %21 = vector.broadcast %20 : vector<1x128xf32> to vector<64x128xf32>
    %22 = arith.addf %19, %21 : vector<64x128xf32>
    %c0_9 = arith.constant 0 : index
    %c0_10 = arith.constant 0 : index
    %23 = vector.load %arg4[%c0_9, %c0_10] : memref<128x512xf32, #tpu.memory_space<vmem>>, vector<128x512xf32>
    %c0_11 = arith.constant 0 : index
    %c0_12 = arith.constant 0 : index
    %24 = vector.load %arg5[%c0_11, %c0_12] : memref<1x512xf32, #tpu.memory_space<vmem>>, vector<1x512xf32>
    %cst_13 = arith.constant dense<0.000000e+00> : vector<64x512xf32>
    %25 = tpu.matmul %22, %23, %cst_13 {dimension_numbers = #tpu.dot_dimension_numbers<[1], [0], [0], [1], [0, 0, 1, 1], [], []>} : vector<64x128xf32>, vector<128x512xf32>, vector<64x512xf32> -> vector<64x512xf32>
    %26 = vector.broadcast %24 : vector<1x512xf32> to vector<64x512xf32>
    %27 = arith.addf %25, %26 : vector<64x512xf32>
    %cst_14 = arith.constant 0.000000e+00 : f32
    %28 = vector.broadcast %cst_14 : f32 to vector<64x512xf32>
    %29 = arith.maximumf %27, %28 : vector<64x512xf32>
    %c0_15 = arith.constant 0 : index
    %c0_16 = arith.constant 0 : index
    %30 = vector.load %arg6[%c0_15, %c0_16] : memref<512x128xf32, #tpu.memory_space<vmem>>, vector<512x128xf32>
    %cst_17 = arith.constant dense<0.000000e+00> : vector<64x128xf32>
    %31 = tpu.matmul %29, %30, %cst_17 {dimension_numbers = #tpu.dot_dimension_numbers<[1], [0], [0], [1], [0, 0, 1, 1], [], []>} : vector<64x512xf32>, vector<512x128xf32>, vector<64x128xf32> -> vector<64x128xf32>
    %c0_18 = arith.constant 0 : index
    %c0_19 = arith.constant 0 : index
    %32 = vector.load %arg7[%c0_18, %c0_19] : memref<1x128xf32, #tpu.memory_space<vmem>>, vector<1x128xf32>
    %33 = vector.broadcast %32 : vector<1x128xf32> to vector<64x128xf32>
    %34 = arith.addf %31, %33 : vector<64x128xf32>
    %c0_20 = arith.constant 0 : index
    %c0_21 = arith.constant 0 : index
    %35 = vector.load %arg8[%c0_20, %c0_21] : memref<64x128xf32, #tpu.memory_space<vmem>>, vector<64x128xf32>
    tpu.vector_store %arg8[%c0_20, %c0_21], %34 {strides = array<i32>} : memref<64x128xf32, #tpu.memory_space<vmem>>, vector<64x128xf32>,
    return
  }
  func.func @transform_0(%arg0: i32) -> (i32, i32) {
    %c0_i32 = arith.constant 0 : i32
    %c0_i32_0 = arith.constant 0 : i32
    return %arg0, %c0_i32 : i32, i32
  }
  func.func @transform_1(%arg0: i32) -> (i32, i32) {
    %c0_i32 = arith.constant 0 : i32
    %c0_i32_0 = arith.constant 0 : i32
    %c0_i32_1 = arith.constant 0 : i32
    return %c0_i32, %c0_i32_0 : i32, i32
  }
  func.func @transform_2(%arg0: i32) -> (i32, i32) {
    %c0_i32 = arith.constant 0 : i32
    %c0_i32_0 = arith.constant 0 : i32
    %c0_i32_1 = arith.constant 0 : i32
    return %c0_i32, %c0_i32_0 : i32, i32
  }
  func.func @transform_3(%arg0: i32) -> (i32, i32) {
    %c0_i32 = arith.constant 0 : i32
    %c0_i32_0 = arith.constant 0 : i32
    %c0_i32_1 = arith.constant 0 : i32
    return %c0_i32, %c0_i32_0 : i32, i32
  }
  func.func @transform_4(%arg0: i32) -> (i32, i32) {
    %c0_i32 = arith.constant 0 : i32
    %c0_i32_0 = arith.constant 0 : i32
    %c0_i32_1 = arith.constant 0 : i32
    return %c0_i32, %c0_i32_0 : i32, i32
  }
  func.func @transform_5(%arg0: i32) -> (i32, i32) {
    %c0_i32 = arith.constant 0 : i32
    %c0_i32_0 = arith.constant 0 : i32
    %c0_i32_1 = arith.constant 0 : i32
    return %c0_i32, %c0_i32_0 : i32, i32
  }
  func.func @transform_6(%arg0: i32) -> (i32, i32) {
    %c0_i32 = arith.constant 0 : i32
    %c0_i32_0 = arith.constant 0 : i32
    %c0_i32_1 = arith.constant 0 : i32
    return %c0_i32, %c0_i32_0 : i32, i32
  }
  func.func @transform_7(%arg0: i32) -> (i32, i32) {
    %c0_i32 = arith.constant 0 : i32
    %c0_i32_0 = arith.constant 0 : i32
    return %arg0, %c0_i32 : i32, i32
  }
}

</mosaic_0001>

<llo_original>
// kernel: tpu_custom_call.1
$region0: #{tpu_custom_call.1}
  #allocation0 [shape = 'u32[]', space=smem, size = 0x4, offset = 0x4, fixed_abs, tag = 'smem constant byte address 0x4 - core index']
  #allocation1 [shape = 'u32[144,128]{1,0:T(1,128)}', space=vmem, size = 0x12000, scoped, tag = 'internal scratch']
  %s0 = inlined_call_operand.hbm [shape: f32[128,128], index: 0, kind: input, shape index: {}]
  %s1 = inlined_call_operand.vmem [shape: f32[1,128], index: 1, kind: input, shape index: {}]
  %s2 = inlined_call_operand.vmem [shape: f32[1,128], index: 2, kind: input, shape index: {}]
  %s3 = inlined_call_operand.hbm [shape: f32[128,512], index: 3, kind: input, shape index: {}]
  %s4 = inlined_call_operand.vmem [shape: f32[1,512], index: 4, kind: input, shape index: {}]
  %s5 = inlined_call_operand.hbm [shape: f32[512,128], index: 5, kind: input, shape index: {}]
  %s6 = inlined_call_operand.vmem [shape: f32[1,128], index: 6, kind: input, shape index: {}]
  %s7 = inlined_call_operand.hbm [shape: f32[128,128], index: 7, kind: output, shape index: {}]
  %s8 = sld [smem:[#allocation0]]
  $region73: #{tpu_custom_call.1} parent=0
    _
  %s10 = ssub.s32 1, %s8
  %s11 = scalar_select 0, %s10, %s8
  $region1: #{tpu_custom_call.1} parent=0
    #allocation2 [shape = 'u8[65536]{0}', space=vmem, size = 0x10000, scoped, tag = 'input window, operand 0']
    #allocation3 [shape = 's32[2]{0}', space=sflag, size = 0x8, scoped, tag = 'scoped memory for tpu_custom_call.1']
    #allocation4 [shape = 's32[2]{0}', space=sflag, size = 0x8, scoped, tag = 'scoped memory for tpu_custom_call.1']
    #allocation5 [shape = 'u8[262144]{0}', space=vmem, size = 0x40000, scoped, tag = 'input window, operand 3, single buffered']
    #allocation6 [shape = 's32[1]{0}', space=sflag, size = 0x4, scoped, tag = 'scoped memory for tpu_custom_call.1']
    #allocation7 [shape = 'u8[262144]{0}', space=vmem, size = 0x40000, scoped, tag = 'input window, operand 5, single buffered']
    #allocation8 [shape = 'u8[65536]{0}', space=vmem, size = 0x10000, scoped, tag = 'output window, operand 0']
    %12 = vsyncpa [#allocation3], 0
    %s13 = scalar_lea.sflag [#allocation3], 1
    %14 = vsyncpa %s13, 0
    %15 = vsyncpa [#allocation6], 0
    %16 = vsyncpa [#allocation4], 0
    %s17 = scalar_lea.sflag [#allocation4], 1
    %18 = vsyncpa %s17, 0
    loop: start=0, step=1, limit=4
    $region2: #{tpu_custom_call.1} parent=1 // loop_pre_header
      _
    $region3: #{tpu_custom_call.1} parent=1 // loop_header
      %s20 = sphi 0, %s24
      %p21 = scmp.ge.s32.totalorder %s20, 4
      %s30 = sphi 0, %s32
      %s33 = sphi 0, %s30
      %s34 = sphi 0, %s33
      %s50 = sphi 0, %s34
      %s54 = sphi 0, %s54
      %s56 = sphi 0, %s54
      %s57 = sphi 0, %s56
      %s71 = sphi 0, %s57
      %s75 = sphi 0, %s75
      %s77 = sphi 0, %s75
      %s78 = sphi 0, %s77
      %s92 = sphi 0, %s78
      %s96 = sphi 0, %s96
      %s98 = sphi 0, %s96
      %s99 = sphi 0, %s98
      %s113 = sphi 0, %s99
      %s117 = sphi 0, %s117
      %s119 = sphi 0, %s117
      %s120 = sphi 0, %s119
      %s134 = sphi 0, %s120
      %s138 = sphi 0, %s138
      %s140 = sphi 0, %s138
      %s141 = sphi 0, %s140
      %s155 = sphi 0, %s141
      %s159 = sphi 0, %s159
      %s161 = sphi 0, %s159
      %s162 = sphi 0, %s161
      %s176 = sphi 0, %s162
      %s182 = sphi 0, %s184
      %s185 = sphi 0, %s182
      %s186 = sphi 0, %s185
      %s202 = sphi 0, %s186
    $region4: #{tpu_custom_call.1} parent=1 // loop_header_branch
      %23 = sbr.rel (%p21) target = $region8
    $region5: #{tpu_custom_call.1} parent=1 // loop_body
      %s25 = ssub.s32 %s20, 1
      %s26 = ssub.s32 %s20, 2
      %s27 = sadd.s32 %s20, 1
      %s28 = ssub.s32 %s20, %s27
      %p29 = scmp.eq.s32.totalorder %s28, 0
      %s31 = sadd.s32 %s30, 1
      %s32 = scalar_select %p29, %s30, %s31
      %p35 = pneg %p29
      %p36 = scmp.eq.s32.totalorder %s20, 1
      %p37 = por %p35, %p36
      %p38 = scmp.ne.s32.totalorder %s30, %s33
      %p39 = scmp.eq.s32.totalorder %s20, 0
      %p40 = por %p38, %p39
      %p41 = scmp.ne.s32.totalorder %s30, %s33
      %p42 = scmp.eq.s32.totalorder %s25, 1
      %p43 = por %p41, %p42
      %p44 = scmp.ne.s32.totalorder %s33, %s34
      %p45 = scmp.eq.s32.totalorder %s25, 0
      %p46 = por %p44, %p45
      %p47 = scmp.ne.s32.totalorder %s33, %s34
      %p48 = scmp.eq.s32.totalorder %s26, 1
      %p49 = por %p47, %p48
      %p51 = scmp.ne.s32.totalorder %s34, %s50
      %p52 = scmp.eq.s32.totalorder %s26, 0
      %p53 = por %p51, %p52
      %s55 = sadd.s32 %s54, 1
      %p58 = scmp.eq.s32.totalorder %s20, 1
      %p59 = scmp.ne.s32.totalorder %s54, %s56
      %p60 = scmp.eq.s32.totalorder %s20, 0
      %p61 = por %p59, %p60
      %p62 = scmp.ne.s32.totalorder %s54, %s56
      %p63 = scmp.eq.s32.totalorder %s25, 1
      %p64 = por %p62, %p63
      %p65 = scmp.ne.s32.totalorder %s56, %s57
      %p66 = scmp.eq.s32.totalorder %s25, 0
      %p67 = por %p65, %p66
      %p68 = scmp.ne.s32.totalorder %s56, %s57
      %p69 = scmp.eq.s32.totalorder %s26, 1
      %p70 = por %p68, %p69
      %p72 = scmp.ne.s32.totalorder %s57, %s71
      %p73 = scmp.eq.s32.totalorder %s26, 0
      %p74 = por %p72, %p73
      %s76 = sadd.s32 %s75, 1
      %p79 = scmp.eq.s32.totalorder %s20, 1
      %p80 = scmp.ne.s32.totalorder %s75, %s77
      %p81 = scmp.eq.s32.totalorder %s20, 0
      %p82 = por %p80, %p81
      %p83 = scmp.ne.s32.totalorder %s75, %s77
      %p84 = scmp.eq.s32.totalorder %s25, 1
      %p85 = por %p83, %p84
      %p86 = scmp.ne.s32.totalorder %s77, %s78
      %p87 = scmp.eq.s32.totalorder %s25, 0
      %p88 = por %p86, %p87
      %p89 = scmp.ne.s32.totalorder %s77, %s78
      %p90 = scmp.eq.s32.totalorder %s26, 1
      %p91 = por %p89, %p90
      %p93 = scmp.ne.s32.totalorder %s78, %s92
      %p94 = scmp.eq.s32.totalorder %s26, 0
      %p95 = por %p93, %p94
      %s97 = sadd.s32 %s96, 1
      %p100 = scmp.eq.s32.totalorder %s20, 1
      %p101 = scmp.ne.s32.totalorder %s96, %s98
      %p102 = scmp.eq.s32.totalorder %s20, 0
      %p103 = por %p101, %p102
      %p104 = scmp.ne.s32.totalorder %s96, %s98
      %p105 = scmp.eq.s32.totalorder %s25, 1
      %p106 = por %p104, %p105
      %p107 = scmp.ne.s32.totalorder %s98, %s99
      %p108 = scmp.eq.s32.totalorder %s25, 0
      %p109 = por %p107, %p108
      %p110 = scmp.ne.s32.totalorder %s98, %s99
      %p111 = scmp.eq.s32.totalorder %s26, 1
      %p112 = por %p110, %p111
      %p114 = scmp.ne.s32.totalorder %s99, %s113
      %p115 = scmp.eq.s32.totalorder %s26, 0
      %p116 = por %p114, %p115
      %s118 = sadd.s32 %s117, 1
      %p121 = scmp.eq.s32.totalorder %s20, 1
      %p122 = scmp.ne.s32.totalorder %s117, %s119
      %p123 = scmp.eq.s32.totalorder %s20, 0
      %p124 = por %p122, %p123
      %p125 = scmp.ne.s32.totalorder %s117, %s119
      %p126 = scmp.eq.s32.totalorder %s25, 1
      %p127 = por %p125, %p126
      %p128 = scmp.ne.s32.totalorder %s119, %s120
      %p129 = scmp.eq.s32.totalorder %s25, 0
      %p130 = por %p128, %p129
      %p131 = scmp.ne.s32.totalorder %s119, %s120
      %p132 = scmp.eq.s32.totalorder %s26, 1
      %p133 = por %p131, %p132
      %p135 = scmp.ne.s32.totalorder %s120, %s134
      %p136 = scmp.eq.s32.totalorder %s26, 0
      %p137 = por %p135, %p136
      %s139 = sadd.s32 %s138, 1
      %p142 = scmp.eq.s32.totalorder %s20, 1
      %p143 = scmp.ne.s32.totalorder %s138, %s140
      %p144 = scmp.eq.s32.totalorder %s20, 0
      %p145 = por %p143, %p144
      %p146 = scmp.ne.s32.totalorder %s138, %s140
      %p147 = scmp.eq.s32.totalorder %s25, 1
      %p148 = por %p146, %p147
      %p149 = scmp.ne.s32.totalorder %s140, %s141
      %p150 = scmp.eq.s32.totalorder %s25, 0
      %p151 = por %p149, %p150
      %p152 = scmp.ne.s32.totalorder %s140, %s141
      %p153 = scmp.eq.s32.totalorder %s26, 1
      %p154 = por %p152, %p153
      %p156 = scmp.ne.s32.totalorder %s141, %s155
      %p157 = scmp.eq.s32.totalorder %s26, 0
      %p158 = por %p156, %p157
      %s160 = sadd.s32 %s159, 1
      %p163 = scmp.eq.s32.totalorder %s20, 1
      %p164 = scmp.ne.s32.totalorder %s159, %s161
      %p165 = scmp.eq.s32.totalorder %s20, 0
      %p166 = por %p164, %p165
      %p167 = scmp.ne.s32.totalorder %s159, %s161
      %p168 = scmp.eq.s32.totalorder %s25, 1
      %p169 = por %p167, %p168
      %p170 = scmp.ne.s32.totalorder %s161, %s162
      %p171 = scmp.eq.s32.totalorder %s25, 0
      %p172 = por %p170, %p171
      %p173 = scmp.ne.s32.totalorder %s161, %s162
      %p174 = scmp.eq.s32.totalorder %s26, 1
      %p175 = por %p173, %p174
      %p177 = scmp.ne.s32.totalorder %s162, %s176
      %p178 = scmp.eq.s32.totalorder %s26, 0
      %p179 = por %p177, %p178
      %s180 = ssub.s32 %s20, %s27
      %p181 = scmp.eq.s32.totalorder %s180, 0
      %s183 = sadd.s32 %s182, 1
      %s184 = scalar_select %p181, %s182, %s183
      %p187 = pneg %p181
      %p188 = scmp.eq.s32.totalorder %s20, 1
      %p189 = por %p187, %p188
      %p190 = scmp.ne.s32.totalorder %s182, %s185
      %p191 = scmp.eq.s32.totalorder %s20, 0
      %p192 = por %p190, %p191
      %p193 = scmp.ne.s32.totalorder %s182, %s185
      %p194 = scmp.eq.s32.totalorder %s25, 1
      %p195 = por %p193, %p194
      %p196 = scmp.ne.s32.totalorder %s185, %s186
      %p197 = scmp.eq.s32.totalorder %s25, 0
      %p198 = por %p196, %p197
      %p199 = scmp.ne.s32.totalorder %s185, %s186
      %p200 = scmp.eq.s32.totalorder %s26, 1
      %p201 = por %p199, %p200
      %p203 = scmp.ne.s32.totalorder %s186, %s202
      %p204 = scmp.eq.s32.totalorder %s26, 0
      %p205 = por %p203, %p204
      %p206 = scmp.le.s32.totalorder 1, %s20
      %p207 = scmp.lt.s32.totalorder %s20, 3
      %p208 = pnand %p206, %p207
      %p209 = pneg %p208
      // Predicated region
      $region9: #{tpu_custom_call.1} parent=5 // pred_check
        _
      $region10: #{tpu_custom_call.1} parent=5 // pred_check_branch
        %211 = sbr.rel (%p208) target = $region12
      $region11: #{tpu_custom_call.1} parent=5 // pred_region
        %s212 = ssub.s32 %s20, 1
        // Predicated region
        $region13: #{tpu_custom_call.1} parent=11 // pred_check
          %p213 = pneg %p67
        $region14: #{tpu_custom_call.1} parent=11 // pred_check_branch
          %215 = sbr.rel (%p213) target = $region16
        $region15: #{tpu_custom_call.1} parent=11 // pred_region
          _
        $region16: #{tpu_custom_call.1} parent=11 // pred_fallthru
          _
        // Predicated region
        $region17: #{tpu_custom_call.1} parent=11 // pred_check
          %p216 = pneg %p88
        $region18: #{tpu_custom_call.1} parent=11 // pred_check_branch
          %218 = sbr.rel (%p216) target = $region20
        $region19: #{tpu_custom_call.1} parent=11 // pred_region
          _
        $region20: #{tpu_custom_call.1} parent=11 // pred_fallthru
          _
        // Predicated region
        $region21: #{tpu_custom_call.1} parent=11 // pred_check
          %p219 = pneg %p109
        $region22: #{tpu_custom_call.1} parent=11 // pred_check_branch
          %221 = sbr.rel (%p219) target = $region24
        $region23: #{tpu_custom_call.1} parent=11 // pred_region
          %s223 = ssub.s32 8192, 8192
          %224 = vsyncadd [#allocation6], %s223
          %s225 = sshll.u32 [#allocation5], 4
          %s226 = int_to_ptr.vmem [resolvable:$true] %s225
          %231 = dma.hbm_to_vmem [thread:$0]  %s3, 8192, %s226, [#allocation6], 512, 512, 32
        $region24: #{tpu_custom_call.1} parent=11 // pred_fallthru
          _
        // Predicated region
        $region25: #{tpu_custom_call.1} parent=11 // pred_check
          %p232 = pneg %p130
        $region26: #{tpu_custom_call.1} parent=11 // pred_check_branch
          %234 = sbr.rel (%p232) target = $region28
        $region27: #{tpu_custom_call.1} parent=11 // pred_region
          _
        $region28: #{tpu_custom_call.1} parent=11 // pred_fallthru
          _
        // Predicated region
        $region29: #{tpu_custom_call.1} parent=11 // pred_check
          %p235 = pneg %p151
        $region30: #{tpu_custom_call.1} parent=11 // pred_check_branch
          %237 = sbr.rel (%p235) target = $region32
        $region31: #{tpu_custom_call.1} parent=11 // pred_region
          %s239 = ssub.s32 8192, 8192
          %240 = vsyncadd [#allocation6], %s239
          %s241 = sshll.u32 [#allocation7], 4
          %s242 = int_to_ptr.vmem [resolvable:$true] %s241
          %247 = dma.hbm_to_vmem [thread:$0]  %s5, 8192, %s242, [#allocation6], 128, 128, 8
        $region32: #{tpu_custom_call.1} parent=11 // pred_fallthru
          _
        // Predicated region
        $region33: #{tpu_custom_call.1} parent=11 // pred_check
          %p248 = pneg %p172
        $region34: #{tpu_custom_call.1} parent=11 // pred_check_branch
          %250 = sbr.rel (%p248) target = $region36
        $region35: #{tpu_custom_call.1} parent=11 // pred_region
          _
        $region36: #{tpu_custom_call.1} parent=11 // pred_fallthru
          _
      $region12: #{tpu_custom_call.1} parent=5 // pred_fallthru
        _
      %p251 = scmp.lt.s32.totalorder %s20, 2
      // Predicated region
      $region37: #{tpu_custom_call.1} parent=5 // pred_check
        %p252 = pneg %p251
      $region38: #{tpu_custom_call.1} parent=5 // pred_check_branch
        %254 = sbr.rel (%p252) target = $region40
      $region39: #{tpu_custom_call.1} parent=5 // pred_region
        // Predicated region
        $region41: #{tpu_custom_call.1} parent=39 // pred_check
          %p255 = pneg %p40
        $region42: #{tpu_custom_call.1} parent=39 // pred_check_branch
          %257 = sbr.rel (%p255) target = $region44
        $region43: #{tpu_custom_call.1} parent=39 // pred_region
          %s258 = sand.u32 %s30, 1
          %s259 = scalar_lea.sflag [#allocation3], %s258
          %s260 = sand.u32 %s30, 1
          %s261 = smul.addr %s260, 64
          %s262 = scalar_lea.vmem [#allocation2], %s261
          %s263 = smul.u32 8, %s20
          %s265 = ssub.s32 1024, 1024
          %266 = vsyncadd %s259, %s265
          %s267 = smul.addr %s263, 128
          %s268 = scalar_lea.hbm %s0, %s267
          %s269 = sshll.u32 %s262, 4
          %s270 = int_to_ptr.vmem [resolvable:$true] %s269
          %275 = dma.hbm_to_vmem [thread:$0]  %s268, 1024, %s270, %s259, 128, 128, 8
        $region44: #{tpu_custom_call.1} parent=39 // pred_fallthru
          _
      $region40: #{tpu_custom_call.1} parent=5 // pred_fallthru
        _
      %p276 = scmp.le.s32.totalorder 1, %s20
      %p277 = scmp.lt.s32.totalorder %s20, 3
      %p278 = pnand %p276, %p277
      %p279 = pneg %p278
      // Predicated region
      $region45: #{tpu_custom_call.1} parent=5 // pred_check
        _
      $region46: #{tpu_custom_call.1} parent=5 // pred_check_branch
        %281 = sbr.rel (%p278) target = $region48
      $region47: #{tpu_custom_call.1} parent=5 // pred_region
        %s282 = ssub.s32 %s20, 1
        %s283 = sand.u32 %s33, 1
        %s284 = scalar_lea.sflag [#allocation3], %s283
        %s285 = sand.u32 %s33, 1
        %s286 = smul.addr %s285, 64
        %s287 = scalar_lea.vmem [#allocation2], %s286
        // Predicated region
        $region49: #{tpu_custom_call.1} parent=47 // pred_check
          %p288 = pneg %p46
        $region50: #{tpu_custom_call.1} parent=47 // pred_check_branch
          %290 = sbr.rel (%p288) target = $region52
        $region51: #{tpu_custom_call.1} parent=47 // pred_region
          %291 = dma.done %s284, 1024
        $region52: #{tpu_custom_call.1} parent=47 // pred_fallthru
          _
        // Predicated region
        $region53: #{tpu_custom_call.1} parent=47 // pred_check
          %p292 = pneg %p109
        $region54: #{tpu_custom_call.1} parent=47 // pred_check_branch
          %294 = sbr.rel (%p292) target = $region56
        $region55: #{tpu_custom_call.1} parent=47 // pred_region
          %295 = dma.done [#allocation6], 8192
        $region56: #{tpu_custom_call.1} parent=47 // pred_fallthru
          _
        // Predicated region
        $region57: #{tpu_custom_call.1} parent=47 // pred_check
          %p296 = pneg %p151
        $region58: #{tpu_custom_call.1} parent=47 // pred_check_branch
          %298 = sbr.rel (%p296) target = $region60
        $region59: #{tpu_custom_call.1} parent=47 // pred_region
          %299 = dma.done [#allocation6], 8192
        $region60: #{tpu_custom_call.1} parent=47 // pred_fallthru
          _
        %s300 = sand.u32 %s33, 1
        %s301 = scalar_lea.sflag [#allocation3], %s300
        %s302 = sand.u32 %s33, 1
        %s303 = smul.addr %s302, 64
        %s304 = scalar_lea.vmem [#allocation2], %s303
        %p305 = pneg %p46
        %p306 = pneg %p43
        %p307 = pneg %p67
        %p308 = pneg %p64
        %p309 = pneg %p88
        %p310 = pneg %p85
        %p311 = pneg %p109
        %p312 = pneg %p106
        %p313 = pneg %p130
        %p314 = pneg %p127
        %p315 = pneg %p151
        %p316 = pneg %p148
        %p317 = pneg %p172
        %p318 = pneg %p169
        %p319 = pneg %p198
        %p320 = pneg %p195
        %s321 = sand.u32 %s185, 1
        %s322 = scalar_lea.sflag [#allocation4], %s321
        %s323 = sand.u32 %s185, 1
        %s324 = smul.addr %s323, 64
        %s325 = scalar_lea.vmem [#allocation8], %s324
        %s326 = smul.u32 8, %s25
        %s327 = smul.u32 8, %s25
        %v328 = vld [vmem:[%s287] sm:$0xff]
        %v329 = vld [vmem:[%s287 + $0x8] sm:$0xff]
        %v330 = vld [vmem:[%s287 + $0x10] sm:$0xff]
        %v331 = vld [vmem:[%s287 + $0x18] sm:$0xff]
        %v332 = vld [vmem:[%s287 + $0x20] sm:$0xff]
        %v333 = vld [vmem:[%s287 + $0x28] sm:$0xff]
        %v334 = vld [vmem:[%s287 + $0x30] sm:$0xff]
        %v335 = vld [vmem:[%s287 + $0x38] sm:$0xff]
        %336 = vadd.xlane.f32.xlu0 %v328
        %v337 = vpop.xlane.xlu0 %336
        %338 = vadd.xlane.f32.xlu0 %v329
        %v339 = vpop.xlane.xlu0 %338
        %340 = vadd.xlane.f32.xlu0 %v330
        %v341 = vpop.xlane.xlu0 %340
        %342 = vadd.xlane.f32.xlu0 %v331
        %v343 = vpop.xlane.xlu0 %342
        %344 = vadd.xlane.f32.xlu0 %v332
        %v345 = vpop.xlane.xlu0 %344
        %346 = vadd.xlane.f32.xlu0 %v333
        %v347 = vpop.xlane.xlu0 %346
        %348 = vadd.xlane.f32.xlu0 %v334
        %v349 = vpop.xlane.xlu0 %348
        %350 = vadd.xlane.f32.xlu0 %v335
        %v351 = vpop.xlane.xlu0 %350
        %v352 = vrcp.pop 128.0
        %v353 = vmul.f32 %v337, %v352
        %v354 = vmul.f32 %v339, %v352
        %v355 = vmul.f32 %v341, %v352
        %v356 = vmul.f32 %v343, %v352
        %v357 = vmul.f32 %v345, %v352
        %v358 = vmul.f32 %v347, %v352
        %v359 = vmul.f32 %v349, %v352
        %v360 = vmul.f32 %v351, %v352
        %v361 = vsub.f32 %v328, %v353
        %v362 = vsub.f32 %v329, %v354
        %v363 = vsub.f32 %v330, %v355
        %v364 = vsub.f32 %v331, %v356
        %v365 = vsub.f32 %v332, %v357
        %v366 = vsub.f32 %v333, %v358
        %v367 = vsub.f32 %v334, %v359
        %v368 = vsub.f32 %v335, %v360
        %v369 = vmul.f32 %v361, %v361
        %v370 = vmul.f32 %v362, %v362
        %v371 = vmul.f32 %v363, %v363
        %v372 = vmul.f32 %v364, %v364
        %v373 = vmul.f32 %v365, %v365
        %v374 = vmul.f32 %v366, %v366
        %v375 = vmul.f32 %v367, %v367
        %v376 = vmul.f32 %v368, %v368
        %377 = vadd.xlane.f32.xlu0 %v369
        %v378 = vpop.xlane.xlu0 %377
        %379 = vadd.xlane.f32.xlu0 %v370
        %v380 = vpop.xlane.xlu0 %379
        %381 = vadd.xlane.f32.xlu0 %v371
        %v382 = vpop.xlane.xlu0 %381
        %383 = vadd.xlane.f32.xlu0 %v372
        %v384 = vpop.xlane.xlu0 %383
        %385 = vadd.xlane.f32.xlu0 %v373
        %v386 = vpop.xlane.xlu0 %385
        %387 = vadd.xlane.f32.xlu0 %v374
        %v388 = vpop.xlane.xlu0 %387
        %389 = vadd.xlane.f32.xlu0 %v375
        %v390 = vpop.xlane.xlu0 %389
        %391 = vadd.xlane.f32.xlu0 %v376
        %v392 = vpop.xlane.xlu0 %391
        %v393 = vmul.f32 %v378, %v352
        %v394 = vmul.f32 %v380, %v352
        %v395 = vmul.f32 %v382, %v352
        %v396 = vmul.f32 %v384, %v352
        %v397 = vmul.f32 %v386, %v352
        %v398 = vmul.f32 %v388, %v352
        %v399 = vmul.f32 %v390, %v352
        %v400 = vmul.f32 %v392, %v352
        %v401 = vadd.f32 %v393, 1e-05
        %v402 = vadd.f32 %v394, 1e-05
        %v403 = vadd.f32 %v395, 1e-05
        %v404 = vadd.f32 %v396, 1e-05
        %v405 = vadd.f32 %v397, 1e-05
        %v406 = vadd.f32 %v398, 1e-05
        %v407 = vadd.f32 %v399, 1e-05
        %v408 = vadd.f32 %v400, 1e-05
        %v409 = vrsqrt.pop %v401
        %v410 = vrsqrt.pop %v402
        %v411 = vrsqrt.pop %v403
        %v412 = vrsqrt.pop %v404
        %v413 = vrsqrt.pop %v405
        %v414 = vrsqrt.pop %v406
        %v415 = vrsqrt.pop %v407
        %v416 = vrsqrt.pop %v408
        %v417 = vmul.f32 %v361, %v409
        %v418 = vmul.f32 %v362, %v410
        %v419 = vmul.f32 %v363, %v411
        %v420 = vmul.f32 %v364, %v412
        %v421 = vmul.f32 %v365, %v413
        %v422 = vmul.f32 %v366, %v414
        %v423 = vmul.f32 %v367, %v415
        %v424 = vmul.f32 %v368, %v416
        %v425 = vld [vmem:[%s1] sm:$0x1]
        %v427 = vlaneseq
        %v428 = vshrl.u32 %v427, 7
        %v429 = vsub.s32 0, %v428
        %v430 = vrot.slane %v425, %v429
        %v432 = vmul.f32 %v417, %v430
        %v433 = vmul.f32 %v418, %v430
        %v434 = vmul.f32 %v419, %v430
        %v435 = vmul.f32 %v420, %v430
        %v436 = vmul.f32 %v421, %v430
        %v437 = vmul.f32 %v422, %v430
        %v438 = vmul.f32 %v423, %v430
        %v439 = vmul.f32 %v424, %v430
        %v440 = vld [vmem:[%s2] sm:$0x1]
        %v442 = vlaneseq
        %v443 = vshrl.u32 %v442, 7
        %v444 = vsub.s32 0, %v443
        %v445 = vrot.slane %v440, %v444
        %v447 = vadd.f32 %v432, %v445
        %v448 = vadd.f32 %v433, %v445
        %v449 = vadd.f32 %v434, %v445
        %v450 = vadd.f32 %v435, %v445
        %v451 = vadd.f32 %v436, %v445
        %v452 = vadd.f32 %v437, %v445
        %v453 = vadd.f32 %v438, %v445
        %v454 = vadd.f32 %v439, %v445
        %v455 = vld [vmem:[#allocation5] sm:$0xff]
        %v456 = vld [vmem:[#allocation5 + $0x8] sm:$0xff]
        %v457 = vld [vmem:[#allocation5 + $0x10] sm:$0xff]
        %v458 = vld [vmem:[#allocation5 + $0x18] sm:$0xff]
        %v459 = vld [vmem:[#allocation5 + $0x20] sm:$0xff]
        %v460 = vld [vmem:[#allocation5 + $0x28] sm:$0xff]
        %v461 = vld [vmem:[#allocation5 + $0x30] sm:$0xff]
        %v462 = vld [vmem:[#allocation5 + $0x38] sm:$0xff]
        %v463 = vld [vmem:[#allocation5 + $0x40] sm:$0xff]
        %v464 = vld [vmem:[#allocation5 + $0x48] sm:$0xff]
        %v465 = vld [vmem:[#allocation5 + $0x50] sm:$0xff]
        %v466 = vld [vmem:[#allocation5 + $0x58] sm:$0xff]
        %v467 = vld [vmem:[#allocation5 + $0x60] sm:$0xff]
        %v468 = vld [vmem:[#allocation5 + $0x68] sm:$0xff]
        %v469 = vld [vmem:[#allocation5 + $0x70] sm:$0xff]
        %v470 = vld [vmem:[#allocation5 + $0x78] sm:$0xff]
        %v471 = vld [vmem:[#allocation5 + $0x80] sm:$0xff]
        %v472 = vld [vmem:[#allocation5 + $0x88] sm:$0xff]
        %v473 = vld [vmem:[#allocation5 + $0x90] sm:$0xff]
        %v474 = vld [vmem:[#allocation5 + $0x98] sm:$0xff]
        %v475 = vld [vmem:[#allocation5 + $0xa0] sm:$0xff]
        %v476 = vld [vmem:[#allocation5 + $0xa8] sm:$0xff]
        %v477 = vld [vmem:[#allocation5 + $0xb0] sm:$0xff]
        %v478 = vld [vmem:[#allocation5 + $0xb8] sm:$0xff]
        %v479 = vld [vmem:[#allocation5 + $0xc0] sm:$0xff]
        %v480 = vld [vmem:[#allocation5 + $0xc8] sm:$0xff]
        %v481 = vld [vmem:[#allocation5 + $0xd0] sm:$0xff]
        %v482 = vld [vmem:[#allocation5 + $0xd8] sm:$0xff]
        %v483 = vld [vmem:[#allocation5 + $0xe0] sm:$0xff]
        %v484 = vld [vmem:[#allocation5 + $0xe8] sm:$0xff]
        %v485 = vld [vmem:[#allocation5 + $0xf0] sm:$0xff]
        %v486 = vld [vmem:[#allocation5 + $0xf8] sm:$0xff]
        %v487 = vld [vmem:[#allocation5 + $0x100] sm:$0xff]
        %v488 = vld [vmem:[#allocation5 + $0x108] sm:$0xff]
        %v489 = vld [vmem:[#allocation5 + $0x110] sm:$0xff]
        %v490 = vld [vmem:[#allocation5 + $0x118] sm:$0xff]
        %v491 = vld [vmem:[#allocation5 + $0x120] sm:$0xff]
        %v492 = vld [vmem:[#allocation5 + $0x128] sm:$0xff]
        %v493 = vld [vmem:[#allocation5 + $0x130] sm:$0xff]
        %v494 = vld [vmem:[#allocation5 + $0x138] sm:$0xff]
        %v495 = vld [vmem:[#allocation5 + $0x140] sm:$0xff]
        %v496 = vld [vmem:[#allocation5 + $0x148] sm:$0xff]
        %v497 = vld [vmem:[#allocation5 + $0x150] sm:$0xff]
        %v498 = vld [vmem:[#allocation5 + $0x158] sm:$0xff]
        %v499 = vld [vmem:[#allocation5 + $0x160] sm:$0xff]
        %v500 = vld [vmem:[#allocation5 + $0x168] sm:$0xff]
        %v501 = vld [vmem:[#allocation5 + $0x170] sm:$0xff]
        %v502 = vld [vmem:[#allocation5 + $0x178] sm:$0xff]
        %v503 = vld [vmem:[#allocation5 + $0x180] sm:$0xff]
        %v504 = vld [vmem:[#allocation5 + $0x188] sm:$0xff]
        %v505 = vld [vmem:[#allocation5 + $0x190] sm:$0xff]
        %v506 = vld [vmem:[#allocation5 + $0x198] sm:$0xff]
        %v507 = vld [vmem:[#allocation5 + $0x1a0] sm:$0xff]
        %v508 = vld [vmem:[#allocation5 + $0x1a8] sm:$0xff]
        %v509 = vld [vmem:[#allocation5 + $0x1b0] sm:$0xff]
        %v510 = vld [vmem:[#allocation5 + $0x1b8] sm:$0xff]
        %v511 = vld [vmem:[#allocation5 + $0x1c0] sm:$0xff]
        %v512 = vld [vmem:[#allocation5 + $0x1c8] sm:$0xff]
        %v513 = vld [vmem:[#allocation5 + $0x1d0] sm:$0xff]
        %v514 = vld [vmem:[#allocation5 + $0x1d8] sm:$0xff]
        %v515 = vld [vmem:[#allocation5 + $0x1e0] sm:$0xff]
        %v516 = vld [vmem:[#allocation5 + $0x1e8] sm:$0xff]
        %v517 = vld [vmem:[#allocation5 + $0x1f0] sm:$0xff]
        %v518 = vld [vmem:[#allocation5 + $0x1f8] sm:$0xff]
        %v519 = vld [vmem:[%s4] sm:$0xf]
        %v521 = vlaneseq
        %v522 = vshrl.u32 %v521, 7
        %v523 = vsub.s32 0, %v522
        %v524 = vrot.slane %v519, %v523
        %v525 = vlaneseq
        %v526 = vshrl.u32 %v525, 7
        %v527 = vsub.s32 1, %v526
        %v528 = vrot.slane %v519, %v527
        %v529 = vlaneseq
        %v530 = vshrl.u32 %v529, 7
        %v531 = vsub.s32 2, %v530
        %v532 = vrot.slane %v519, %v531
        %v533 = vlaneseq
        %v534 = vshrl.u32 %v533, 7
        %v535 = vsub.s32 3, %v534
        %v536 = vrot.slane %v519, %v535
        %541 = vmatprep.subr.mxu0 %v456
        %542 = vmatpush1.msra.mxu0 %v455
        %543 = vmatprep.subr.mxu0 %v460
        %544 = vmatpush1.msra.mxu0 %v459
        %545 = vmatprep.subr.mxu0 %v464
        %546 = vmatpush1.msra.mxu0 %v463
        %547 = vmatprep.subr.mxu0 %v468
        %548 = vmatpush1.msra.mxu0 %v467
        %549 = vmatprep.subr.mxu0 %v472
        %550 = vmatpush1.msra.mxu0 %v471
        %551 = vmatprep.subr.mxu0 %v476
        %552 = vmatpush1.msra.mxu0 %v475
        %553 = vmatprep.subr.mxu0 %v480
        %554 = vmatpush1.msra.mxu0 %v479
        %555 = vmatprep.subr.mxu0 %v484
        %556 = vmatpush1.msra.mxu0 %v483
        %557 = vmatprep.subr.mxu0 %v488
        %558 = vmatpush1.msra.mxu0 %v487
        %559 = vmatprep.subr.mxu0 %v492
        %560 = vmatpush1.msra.mxu0 %v491
        %561 = vmatprep.subr.mxu0 %v496
        %562 = vmatpush1.msra.mxu0 %v495
        %563 = vmatprep.subr.mxu0 %v500
        %564 = vmatpush1.msra.mxu0 %v499
        %565 = vmatprep.subr.mxu0 %v504
        %566 = vmatpush1.msra.mxu0 %v503
        %567 = vmatprep.subr.mxu0 %v508
        %568 = vmatpush1.msra.mxu0 %v507
        %569 = vmatprep.subr.mxu0 %v512
        %570 = vmatpush1.msra.mxu0 %v511
        %571 = vmatprep.subr.mxu0 %v516
        %572 = vmatpush1.msra.mxu0 %v515
        %573 = vmatprep.subr.mxu0 0.0
        %574 = vmatpush1.msra.mxu0 0.0
        %575 = vmatprep.subr.mxu0 0.0
        %576 = vmatpush1.msra.mxu0 0.0
        %577 = vmatprep.subr.mxu0 0.0
        %578 = vmatpush1.msra.mxu0 0.0
        %579 = vmatprep.subr.mxu0 0.0
        %580 = vmatpush1.msra.mxu0 0.0
        %581 = vmatprep.subr.mxu0 0.0
        %582 = vmatpush1.msra.mxu0 0.0
        %583 = vmatprep.subr.mxu0 0.0
        %584 = vmatpush1.msra.mxu0 0.0
        %585 = vmatprep.subr.mxu0 0.0
        %586 = vmatpush1.msra.mxu0 0.0
        %587 = vmatprep.subr.mxu0 0.0
        %588 = vmatpush1.msra.mxu0 0.0
        %589 = vmatprep.subr.mxu0 0.0
        %590 = vmatpush1.msra.mxu0 0.0
        %591 = vmatprep.subr.mxu0 0.0
        %592 = vmatpush1.msra.mxu0 0.0
        %593 = vmatprep.subr.mxu0 0.0
        %594 = vmatpush1.msra.mxu0 0.0
        %595 = vmatprep.subr.mxu0 0.0
        %596 = vmatpush1.msra.mxu0 0.0
        %597 = vmatprep.subr.mxu0 0.0
        %598 = vmatpush1.msra.mxu0 0.0
        %599 = vmatprep.subr.mxu0 0.0
        %600 = vmatpush1.msra.mxu0 0.0
        %601 = vmatprep.subr.mxu0 0.0
        %602 = vmatpush1.msra.mxu0 0.0
        %603 = vmatprep.subr.mxu0 0.0
        %604 = vmatpush1.msra.mxu0 0.0
        %605 = vmatprep.mubr.f32.mxu0 0.0
        %606 = vmatmul.mubr.f32.gmra.mrb[0].mxu0 %v447
        %v607 = vpop.f32.mrb[0].mxu0
        %v608 = vadd.f32 %v524, %v607
        %v609 = vpop.f32.mrb[0].mxu0
        %v610 = vadd.f32 %v528, %v609
        %611 = vmatprep.mubr.f32.mxu0 0.0
        %612 = vmatmul.mubr.f32.gmra.mrb[0].mxu0 %v448
        %v613 = vpop.f32.mrb[0].mxu0
        %v614 = vadd.f32 %v524, %v613
        %v615 = vpop.f32.mrb[0].mxu0
        %v616 = vadd.f32 %v528, %v615
        %617 = vmatprep.mubr.f32.mxu0 0.0
        %618 = vmatmul.mubr.f32.gmra.mrb[0].mxu0 %v449
        %v619 = vpop.f32.mrb[0].mxu0
        %v620 = vadd.f32 %v524, %v619
        %v621 = vpop.f32.mrb[0].mxu0
        %v622 = vadd.f32 %v528, %v621
        %623 = vmatprep.mubr.f32.mxu0 0.0
        %624 = vmatmul.mubr.f32.gmra.mrb[0].mxu0 %v450
        %v625 = vpop.f32.mrb[0].mxu0
        %v626 = vadd.f32 %v524, %v625
        %v627 = vpop.f32.mrb[0].mxu0
        %v628 = vadd.f32 %v528, %v627
        %629 = vmatprep.mubr.f32.mxu0 0.0
        %630 = vmatmul.mubr.f32.gmra.mrb[0].mxu0 %v451
        %v631 = vpop.f32.mrb[0].mxu0
        %v632 = vadd.f32 %v524, %v631
        %v633 = vpop.f32.mrb[0].mxu0
        %v634 = vadd.f32 %v528, %v633
        %635 = vmatprep.mubr.f32.mxu0 0.0
        %636 = vmatmul.mubr.f32.gmra.mrb[0].mxu0 %v452
        %v637 = vpop.f32.mrb[0].mxu0
        %v638 = vadd.f32 %v524, %v637
        %v639 = vpop.f32.mrb[0].mxu0
        %v640 = vadd.f32 %v528, %v639
        %641 = vmatprep.mubr.f32.mxu0 0.0
        %642 = vmatmul.mubr.f32.gmra.mrb[0].mxu0 %v453
        %v643 = vpop.f32.mrb[0].mxu0
        %v644 = vadd.f32 %v524, %v643
        %v645 = vpop.f32.mrb[0].mxu0
        %v646 = vadd.f32 %v528, %v645
        %647 = vmatprep.mubr.f32.mxu0 0.0
        %648 = vmatmul.mubr.f32.gmra.mrb[0].mxu0 %v454
        %v649 = vpop.f32.mrb[0].mxu0
        %v650 = vadd.f32 %v524, %v649
        %v651 = vpop.f32.mrb[0].mxu0
        %v652 = vadd.f32 %v528, %v651
        %653 = vdwg.mxu0
        %654 = vmatprep.subr.mxu0 %v458
        %655 = vmatpush1.msra.mxu0 %v457
        %656 = vmatprep.subr.mxu0 %v462
        %657 = vmatpush1.msra.mxu0 %v461
        %658 = vmatprep.subr.mxu0 %v466
        %659 = vmatpush1.msra.mxu0 %v465
        %660 = vmatprep.subr.mxu0 %v470
        %661 = vmatpush1.msra.mxu0 %v469
        %662 = vmatprep.subr.mxu0 %v474
        %663 = vmatpush1.msra.mxu0 %v473
        %664 = vmatprep.subr.mxu0 %v478
        %665 = vmatpush1.msra.mxu0 %v477
        %666 = vmatprep.subr.mxu0 %v482
        %667 = vmatpush1.msra.mxu0 %v481
        %668 = vmatprep.subr.mxu0 %v486
        %669 = vmatpush1.msra.mxu0 %v485
        %670 = vmatprep.subr.mxu0 %v490
        %671 = vmatpush1.msra.mxu0 %v489
        %672 = vmatprep.subr.mxu0 %v494
        %673 = vmatpush1.msra.mxu0 %v493
        %674 = vmatprep.subr.mxu0 %v498
        %675 = vmatpush1.msra.mxu0 %v497
        %676 = vmatprep.subr.mxu0 %v502
        %677 = vmatpush1.msra.mxu0 %v501
        %678 = vmatprep.subr.mxu0 %v506
        %679 = vmatpush1.msra.mxu0 %v505
        %680 = vmatprep.subr.mxu0 %v510
        %681 = vmatpush1.msra.mxu0 %v509
        %682 = vmatprep.subr.mxu0 %v514
        %683 = vmatpush1.msra.mxu0 %v513
        %684 = vmatprep.subr.mxu0 %v518
        %685 = vmatpush1.msra.mxu0 %v517
        %686 = vmatprep.subr.mxu0 0.0
        %687 = vmatpush1.msra.mxu0 0.0
        %688 = vmatprep.subr.mxu0 0.0
        %689 = vmatpush1.msra.mxu0 0.0
        %690 = vmatprep.subr.mxu0 0.0
        %691 = vmatpush1.msra.mxu0 0.0
        %692 = vmatprep.subr.mxu0 0.0
        %693 = vmatpush1.msra.mxu0 0.0
        %694 = vmatprep.subr.mxu0 0.0
        %695 = vmatpush1.msra.mxu0 0.0
        %696 = vmatprep.subr.mxu0 0.0
        %697 = vmatpush1.msra.mxu0 0.0
        %698 = vmatprep.subr.mxu0 0.0
        %699 = vmatpush1.msra.mxu0 0.0
        %700 = vmatprep.subr.mxu0 0.0
        %701 = vmatpush1.msra.mxu0 0.0
        %702 = vmatprep.subr.mxu0 0.0
        %703 = vmatpush1.msra.mxu0 0.0
        %704 = vmatprep.subr.mxu0 0.0
        %705 = vmatpush1.msra.mxu0 0.0
        %706 = vmatprep.subr.mxu0 0.0
        %707 = vmatpush1.msra.mxu0 0.0
        %708 = vmatprep.subr.mxu0 0.0
        %709 = vmatpush1.msra.mxu0 0.0
        %710 = vmatprep.subr.mxu0 0.0
        %711 = vmatpush1.msra.mxu0 0.0
        %712 = vmatprep.subr.mxu0 0.0
        %713 = vmatpush1.msra.mxu0 0.0
        %714 = vmatprep.subr.mxu0 0.0
        %715 = vmatpush1.msra.mxu0 0.0
        %716 = vmatprep.subr.mxu0 0.0
        %717 = vmatpush1.msra.mxu0 0.0
        %718 = vmatprep.mubr.f32.mxu0 0.0
        %719 = vmatmul.mubr.f32.gmra.mrb[0].mxu0 %v447
        %v720 = vpop.f32.mrb[0].mxu0
        %v721 = vadd.f32 %v532, %v720
        %v722 = vpop.f32.mrb[0].mxu0
        %v723 = vadd.f32 %v536, %v722
        %724 = vmatprep.mubr.f32.mxu0 0.0
        %725 = vmatmul.mubr.f32.gmra.mrb[0].mxu0 %v448
        %v726 = vpop.f32.mrb[0].mxu0
        %v727 = vadd.f32 %v532, %v726
        %v728 = vpop.f32.mrb[0].mxu0
        %v729 = vadd.f32 %v536, %v728
        %730 = vmatprep.mubr.f32.mxu0 0.0
        %731 = vmatmul.mubr.f32.gmra.mrb[0].mxu0 %v449
        %v732 = vpop.f32.mrb[0].mxu0
        %v733 = vadd.f32 %v532, %v732
        %v734 = vpop.f32.mrb[0].mxu0
        %v735 = vadd.f32 %v536, %v734
        %736 = vmatprep.mubr.f32.mxu0 0.0
        %737 = vmatmul.mubr.f32.gmra.mrb[0].mxu0 %v450
        %v738 = vpop.f32.mrb[0].mxu0
        %v739 = vadd.f32 %v532, %v738
        %v740 = vpop.f32.mrb[0].mxu0
        %v741 = vadd.f32 %v536, %v740
        %742 = vmatprep.mubr.f32.mxu0 0.0
        %743 = vmatmul.mubr.f32.gmra.mrb[0].mxu0 %v451
        %v744 = vpop.f32.mrb[0].mxu0
        %v745 = vadd.f32 %v532, %v744
        %v746 = vpop.f32.mrb[0].mxu0
        %v747 = vadd.f32 %v536, %v746
        %748 = vmatprep.mubr.f32.mxu0 0.0
        %749 = vmatmul.mubr.f32.gmra.mrb[0].mxu0 %v452
        %v750 = vpop.f32.mrb[0].mxu0
        %v751 = vadd.f32 %v532, %v750
        %v752 = vpop.f32.mrb[0].mxu0
        %v753 = vadd.f32 %v536, %v752
        %754 = vmatprep.mubr.f32.mxu0 0.0
        %755 = vmatmul.mubr.f32.gmra.mrb[0].mxu0 %v453
        %v756 = vpop.f32.mrb[0].mxu0
        %v757 = vadd.f32 %v532, %v756
        %v758 = vpop.f32.mrb[0].mxu0
        %v759 = vadd.f32 %v536, %v758
        %760 = vmatprep.mubr.f32.mxu0 0.0
        %761 = vmatmul.mubr.f32.gmra.mrb[0].mxu0 %v454
        %v762 = vpop.f32.mrb[0].mxu0
        %v763 = vadd.f32 %v532, %v762
        %v764 = vpop.f32.mrb[0].mxu0
        %v765 = vadd.f32 %v536, %v764
        %766 = vdwg.mxu0
        %v767 = vmax.f32 %v608, 0.0
        %v768 = vmax.f32 %v610, 0.0
        %v769 = vmax.f32 %v721, 0.0
        %v770 = vmax.f32 %v723, 0.0
        %v771 = vmax.f32 %v614, 0.0
        %v772 = vmax.f32 %v616, 0.0
        %v773 = vmax.f32 %v727, 0.0
        %v774 = vmax.f32 %v729, 0.0
        %v775 = vmax.f32 %v620, 0.0
        %v776 = vmax.f32 %v622, 0.0
        %v777 = vmax.f32 %v733, 0.0
        %v778 = vmax.f32 %v735, 0.0
        %v779 = vmax.f32 %v626, 0.0
        %v780 = vmax.f32 %v628, 0.0
        %v781 = vmax.f32 %v739, 0.0
        %v782 = vmax.f32 %v741, 0.0
        %v783 = vmax.f32 %v632, 0.0
        %v784 = vmax.f32 %v634, 0.0
        %v785 = vmax.f32 %v745, 0.0
        %v786 = vmax.f32 %v747, 0.0
        %v787 = vmax.f32 %v638, 0.0
        %v788 = vmax.f32 %v640, 0.0
        %v789 = vmax.f32 %v751, 0.0
        %v790 = vmax.f32 %v753, 0.0
        %v791 = vmax.f32 %v644, 0.0
        %v792 = vmax.f32 %v646, 0.0
        %v793 = vmax.f32 %v757, 0.0
        %v794 = vmax.f32 %v759, 0.0
        %v795 = vmax.f32 %v650, 0.0
        %v796 = vmax.f32 %v652, 0.0
        %v797 = vmax.f32 %v763, 0.0
        %v798 = vmax.f32 %v765, 0.0
        %v799 = vld [vmem:[#allocation7] sm:$0xff]
        %v800 = vld [vmem:[#allocation7 + $0x8] sm:$0xff]
        %v801 = vld [vmem:[#allocation7 + $0x10] sm:$0xff]
        %v802 = vld [vmem:[#allocation7 + $0x18] sm:$0xff]
        %v803 = vld [vmem:[#allocation7 + $0x20] sm:$0xff]
        %v804 = vld [vmem:[#allocation7 + $0x28] sm:$0xff]
        %v805 = vld [vmem:[#allocation7 + $0x30] sm:$0xff]
        %v806 = vld [vmem:[#allocation7 + $0x38] sm:$0xff]
        %v807 = vld [vmem:[#allocation7 + $0x40] sm:$0xff]
        %v808 = vld [vmem:[#allocation7 + $0x48] sm:$0xff]
        %v809 = vld [vmem:[#allocation7 + $0x50] sm:$0xff]
        %v810 = vld [vmem:[#allocation7 + $0x58] sm:$0xff]
        %v811 = vld [vmem:[#allocation7 + $0x60] sm:$0xff]
        %v812 = vld [vmem:[#allocation7 + $0x68] sm:$0xff]
        %v813 = vld [vmem:[#allocation7 + $0x70] sm:$0xff]
        %v814 = vld [vmem:[#allocation7 + $0x78] sm:$0xff]
        %v815 = vld [vmem:[#allocation7 + $0x80] sm:$0xff]
        %v816 = vld [vmem:[#allocation7 + $0x88] sm:$0xff]
        %v817 = vld [vmem:[#allocation7 + $0x90] sm:$0xff]
        %v818 = vld [vmem:[#allocation7 + $0x98] sm:$0xff]
        %v819 = vld [vmem:[#allocation7 + $0xa0] sm:$0xff]
        %v820 = vld [vmem:[#allocation7 + $0xa8] sm:$0xff]
        %v821 = vld [vmem:[#allocation7 + $0xb0] sm:$0xff]
        %v822 = vld [vmem:[#allocation7 + $0xb8] sm:$0xff]
        %v823 = vld [vmem:[#allocation7 + $0xc0] sm:$0xff]
        %v824 = vld [vmem:[#allocation7 + $0xc8] sm:$0xff]
        %v825 = vld [vmem:[#allocation7 + $0xd0] sm:$0xff]
        %v826 = vld [vmem:[#allocation7 + $0xd8] sm:$0xff]
        %v827 = vld [vmem:[#allocation7 + $0xe0] sm:$0xff]
        %v828 = vld [vmem:[#allocation7 + $0xe8] sm:$0xff]
        %v829 = vld [vmem:[#allocation7 + $0xf0] sm:$0xff]
        %v830 = vld [vmem:[#allocation7 + $0xf8] sm:$0xff]
        %v831 = vld [vmem:[#allocation7 + $0x100] sm:$0xff]
        %v832 = vld [vmem:[#allocation7 + $0x108] sm:$0xff]
        %v833 = vld [vmem:[#allocation7 + $0x110] sm:$0xff]
        %v834 = vld [vmem:[#allocation7 + $0x118] sm:$0xff]
        %v835 = vld [vmem:[#allocation7 + $0x120] sm:$0xff]
        %v836 = vld [vmem:[#allocation7 + $0x128] sm:$0xff]
        %v837 = vld [vmem:[#allocation7 + $0x130] sm:$0xff]
        %v838 = vld [vmem:[#allocation7 + $0x138] sm:$0xff]
        %v839 = vld [vmem:[#allocation7 + $0x140] sm:$0xff]
        %v840 = vld [vmem:[#allocation7 + $0x148] sm:$0xff]
        %v841 = vld [vmem:[#allocation7 + $0x150] sm:$0xff]
        %v842 = vld [vmem:[#allocation7 + $0x158] sm:$0xff]
        %v843 = vld [vmem:[#allocation7 + $0x160] sm:$0xff]
        %v844 = vld [vmem:[#allocation7 + $0x168] sm:$0xff]
        %v845 = vld [vmem:[#allocation7 + $0x170] sm:$0xff]
        %v846 = vld [vmem:[#allocation7 + $0x178] sm:$0xff]
        %v847 = vld [vmem:[#allocation7 + $0x180] sm:$0xff]
        %v848 = vld [vmem:[#allocation7 + $0x188] sm:$0xff]
        %v849 = vld [vmem:[#allocation7 + $0x190] sm:$0xff]
        %v850 = vld [vmem:[#allocation7 + $0x198] sm:$0xff]
        %v851 = vld [vmem:[#allocation7 + $0x1a0] sm:$0xff]
        %v852 = vld [vmem:[#allocation7 + $0x1a8] sm:$0xff]
        %v853 = vld [vmem:[#allocation7 + $0x1b0] sm:$0xff]
        %v854 = vld [vmem:[#allocation7 + $0x1b8] sm:$0xff]
        %v855 = vld [vmem:[#allocation7 + $0x1c0] sm:$0xff]
        %v856 = vld [vmem:[#allocation7 + $0x1c8] sm:$0xff]
        %v857 = vld [vmem:[#allocation7 + $0x1d0] sm:$0xff]
        %v858 = vld [vmem:[#allocation7 + $0x1d8] sm:$0xff]
        %v859 = vld [vmem:[#allocation7 + $0x1e0] sm:$0xff]
        %v860 = vld [vmem:[#allocation7 + $0x1e8] sm:$0xff]
        %v861 = vld [vmem:[#allocation7 + $0x1f0] sm:$0xff]
        %v862 = vld [vmem:[#allocation7 + $0x1f8] sm:$0xff]
        %v863 = vld [vmem:[%s6] sm:$0x1]
        %v865 = vlaneseq
        %v866 = vshrl.u32 %v865, 7
        %v867 = vsub.s32 0, %v866
        %v868 = vrot.slane %v863, %v867
        %870 = vmatprep.subr.mxu0 0.0
        %871 = vmatpush1.msra.mxu0 %v799
        %872 = vmatprep.subr.mxu0 0.0
        %873 = vmatpush1.msra.mxu0 %v800
        %874 = vmatprep.subr.mxu0 0.0
        %875 = vmatpush1.msra.mxu0 %v801
        %876 = vmatprep.subr.mxu0 0.0
        %877 = vmatpush1.msra.mxu0 %v802
        %878 = vmatprep.subr.mxu0 0.0
        %879 = vmatpush1.msra.mxu0 %v803
        %880 = vmatprep.subr.mxu0 0.0
        %881 = vmatpush1.msra.mxu0 %v804
        %882 = vmatprep.subr.mxu0 0.0
        %883 = vmatpush1.msra.mxu0 %v805
        %884 = vmatprep.subr.mxu0 0.0
        %885 = vmatpush1.msra.mxu0 %v806
        %886 = vmatprep.subr.mxu0 0.0
        %887 = vmatpush1.msra.mxu0 %v807
        %888 = vmatprep.subr.mxu0 0.0
        %889 = vmatpush1.msra.mxu0 %v808
        %890 = vmatprep.subr.mxu0 0.0
        %891 = vmatpush1.msra.mxu0 %v809
        %892 = vmatprep.subr.mxu0 0.0
        %893 = vmatpush1.msra.mxu0 %v810
        %894 = vmatprep.subr.mxu0 0.0
        %895 = vmatpush1.msra.mxu0 %v811
        %896 = vmatprep.subr.mxu0 0.0
        %897 = vmatpush1.msra.mxu0 %v812
        %898 = vmatprep.subr.mxu0 0.0
        %899 = vmatpush1.msra.mxu0 %v813
        %900 = vmatprep.subr.mxu0 0.0
        %901 = vmatpush1.msra.mxu0 %v814
        %902 = vmatprep.subr.mxu0 0.0
        %903 = vmatpush1.msra.mxu0 %v815
        %904 = vmatprep.subr.mxu0 0.0
        %905 = vmatpush1.msra.mxu0 %v816
        %906 = vmatprep.subr.mxu0 0.0
        %907 = vmatpush1.msra.mxu0 %v817
        %908 = vmatprep.subr.mxu0 0.0
        %909 = vmatpush1.msra.mxu0 %v818
        %910 = vmatprep.subr.mxu0 0.0
        %911 = vmatpush1.msra.mxu0 %v819
        %912 = vmatprep.subr.mxu0 0.0
        %913 = vmatpush1.msra.mxu0 %v820
        %914 = vmatprep.subr.mxu0 0.0
        %915 = vmatpush1.msra.mxu0 %v821
        %916 = vmatprep.subr.mxu0 0.0
        %917 = vmatpush1.msra.mxu0 %v822
        %918 = vmatprep.subr.mxu0 0.0
        %919 = vmatpush1.msra.mxu0 %v823
        %920 = vmatprep.subr.mxu0 0.0
        %921 = vmatpush1.msra.mxu0 %v824
        %922 = vmatprep.subr.mxu0 0.0
        %923 = vmatpush1.msra.mxu0 %v825
        %924 = vmatprep.subr.mxu0 0.0
        %925 = vmatpush1.msra.mxu0 %v826
        %926 = vmatprep.subr.mxu0 0.0
        %927 = vmatpush1.msra.mxu0 %v827
        %928 = vmatprep.subr.mxu0 0.0
        %929 = vmatpush1.msra.mxu0 %v828
        %930 = vmatprep.subr.mxu0 0.0
        %931 = vmatpush1.msra.mxu0 %v829
        %932 = vmatprep.subr.mxu0 0.0
        %933 = vmatpush1.msra.mxu0 %v830
        %934 = vmatprep.mubr.f32.mxu0 %v768
        %935 = vmatmul.mubr.f32.gmra.mrb[0].mxu0 %v767
        %v936 = vpop.f32.mrb[0].mxu0
        %v937 = vadd.f32 %v868, %v936
        %v938 = vpop.f32.mrb[0].mxu0
        %939 = vmatprep.mubr.f32.mxu0 %v772
        %940 = vmatmul.mubr.f32.gmra.mrb[0].mxu0 %v771
        %v941 = vpop.f32.mrb[0].mxu0
        %v942 = vadd.f32 %v868, %v941
        %v943 = vpop.f32.mrb[0].mxu0
        %944 = vmatprep.mubr.f32.mxu0 %v776
        %945 = vmatmul.mubr.f32.gmra.mrb[0].mxu0 %v775
        %v946 = vpop.f32.mrb[0].mxu0
        %v947 = vadd.f32 %v868, %v946
        %v948 = vpop.f32.mrb[0].mxu0
        %949 = vmatprep.mubr.f32.mxu0 %v780
        %950 = vmatmul.mubr.f32.gmra.mrb[0].mxu0 %v779
        %v951 = vpop.f32.mrb[0].mxu0
        %v952 = vadd.f32 %v868, %v951
        %v953 = vpop.f32.mrb[0].mxu0
        %954 = vmatprep.mubr.f32.mxu0 %v784
        %955 = vmatmul.mubr.f32.gmra.mrb[0].mxu0 %v783
        %v956 = vpop.f32.mrb[0].mxu0
        %v957 = vadd.f32 %v868, %v956
        %v958 = vpop.f32.mrb[0].mxu0
        %959 = vmatprep.mubr.f32.mxu0 %v788
        %960 = vmatmul.mubr.f32.gmra.mrb[0].mxu0 %v787
        %v961 = vpop.f32.mrb[0].mxu0
        %v962 = vadd.f32 %v868, %v961
        %v963 = vpop.f32.mrb[0].mxu0
        %964 = vmatprep.mubr.f32.mxu0 %v792
        %965 = vmatmul.mubr.f32.gmra.mrb[0].mxu0 %v791
        %v966 = vpop.f32.mrb[0].mxu0
        %v967 = vadd.f32 %v868, %v966
        %v968 = vpop.f32.mrb[0].mxu0
        %969 = vmatprep.mubr.f32.mxu0 %v796
        %970 = vmatmul.mubr.f32.gmra.mrb[0].mxu0 %v795
        %v971 = vpop.f32.mrb[0].mxu0
        %v972 = vadd.f32 %v868, %v971
        %v973 = vpop.f32.mrb[0].mxu0
        %974 = vdwg.mxu0
        %975 = vmatprep.subr.mxu0 0.0
        %976 = vmatpush1.msra.mxu0 %v831
        %977 = vmatprep.subr.mxu0 0.0
        %978 = vmatpush1.msra.mxu0 %v832
        %979 = vmatprep.subr.mxu0 0.0
        %980 = vmatpush1.msra.mxu0 %v833
        %981 = vmatprep.subr.mxu0 0.0
        %982 = vmatpush1.msra.mxu0 %v834
        %983 = vmatprep.subr.mxu0 0.0
        %984 = vmatpush1.msra.mxu0 %v835
        %985 = vmatprep.subr.mxu0 0.0
        %986 = vmatpush1.msra.mxu0 %v836
        %987 = vmatprep.subr.mxu0 0.0
        %988 = vmatpush1.msra.mxu0 %v837
        %989 = vmatprep.subr.mxu0 0.0
        %990 = vmatpush1.msra.mxu0 %v838
        %991 = vmatprep.subr.mxu0 0.0
        %992 = vmatpush1.msra.mxu0 %v839
        %993 = vmatprep.subr.mxu0 0.0
        %994 = vmatpush1.msra.mxu0 %v840
        %995 = vmatprep.subr.mxu0 0.0
        %996 = vmatpush1.msra.mxu0 %v841
        %997 = vmatprep.subr.mxu0 0.0
        %998 = vmatpush1.msra.mxu0 %v842
        %999 = vmatprep.subr.mxu0 0.0
        %1000 = vmatpush1.msra.mxu0 %v843
        %1001 = vmatprep.subr.mxu0 0.0
        %1002 = vmatpush1.msra.mxu0 %v844
        %1003 = vmatprep.subr.mxu0 0.0
        %1004 = vmatpush1.msra.mxu0 %v845
        %1005 = vmatprep.subr.mxu0 0.0
        %1006 = vmatpush1.msra.mxu0 %v846
        %1007 = vmatprep.subr.mxu0 0.0
        %1008 = vmatpush1.msra.mxu0 %v847
        %1009 = vmatprep.subr.mxu0 0.0
        %1010 = vmatpush1.msra.mxu0 %v848
        %1011 = vmatprep.subr.mxu0 0.0
        %1012 = vmatpush1.msra.mxu0 %v849
        %1013 = vmatprep.subr.mxu0 0.0
        %1014 = vmatpush1.msra.mxu0 %v850
        %1015 = vmatprep.subr.mxu0 0.0
        %1016 = vmatpush1.msra.mxu0 %v851
        %1017 = vmatprep.subr.mxu0 0.0
        %1018 = vmatpush1.msra.mxu0 %v852
        %1019 = vmatprep.subr.mxu0 0.0
        %1020 = vmatpush1.msra.mxu0 %v853
        %1021 = vmatprep.subr.mxu0 0.0
        %1022 = vmatpush1.msra.mxu0 %v854
        %1023 = vmatprep.subr.mxu0 0.0
        %1024 = vmatpush1.msra.mxu0 %v855
        %1025 = vmatprep.subr.mxu0 0.0
        %1026 = vmatpush1.msra.mxu0 %v856
        %1027 = vmatprep.subr.mxu0 0.0
        %1028 = vmatpush1.msra.mxu0 %v857
        %1029 = vmatprep.subr.mxu0 0.0
        %1030 = vmatpush1.msra.mxu0 %v858
        %1031 = vmatprep.subr.mxu0 0.0
        %1032 = vmatpush1.msra.mxu0 %v859
        %1033 = vmatprep.subr.mxu0 0.0
        %1034 = vmatpush1.msra.mxu0 %v860
        %1035 = vmatprep.subr.mxu0 0.0
        %1036 = vmatpush1.msra.mxu0 %v861
        %1037 = vmatprep.subr.mxu0 0.0
        %1038 = vmatpush1.msra.mxu0 %v862
        %1039 = vmatprep.mubr.f32.mxu0 %v770
        %1040 = vmatmul.mubr.f32.gmra.mrb[0].mxu0 %v769
        %v1041 = vpop.f32.mrb[0].mxu0
        %v1042 = vadd.f32 %v937, %v1041
        %v1043 = vpop.f32.mrb[0].mxu0
        %1044 = vmatprep.mubr.f32.mxu0 %v774
        %1045 = vmatmul.mubr.f32.gmra.mrb[0].mxu0 %v773
        %v1046 = vpop.f32.mrb[0].mxu0
        %v1047 = vadd.f32 %v942, %v1046
        %v1048 = vpop.f32.mrb[0].mxu0
        %1049 = vmatprep.mubr.f32.mxu0 %v778
        %1050 = vmatmul.mubr.f32.gmra.mrb[0].mxu0 %v777
        %v1051 = vpop.f32.mrb[0].mxu0
        %v1052 = vadd.f32 %v947, %v1051
        %v1053 = vpop.f32.mrb[0].mxu0
        %1054 = vmatprep.mubr.f32.mxu0 %v782
        %1055 = vmatmul.mubr.f32.gmra.mrb[0].mxu0 %v781
        %v1056 = vpop.f32.mrb[0].mxu0
        %v1057 = vadd.f32 %v952, %v1056
        %v1058 = vpop.f32.mrb[0].mxu0
        %1059 = vmatprep.mubr.f32.mxu0 %v786
        %1060 = vmatmul.mubr.f32.gmra.mrb[0].mxu0 %v785
        %v1061 = vpop.f32.mrb[0].mxu0
        %v1062 = vadd.f32 %v957, %v1061
        %v1063 = vpop.f32.mrb[0].mxu0
        %1064 = vmatprep.mubr.f32.mxu0 %v790
        %1065 = vmatmul.mubr.f32.gmra.mrb[0].mxu0 %v789
        %v1066 = vpop.f32.mrb[0].mxu0
        %v1067 = vadd.f32 %v962, %v1066
        %v1068 = vpop.f32.mrb[0].mxu0
        %1069 = vmatprep.mubr.f32.mxu0 %v794
        %1070 = vmatmul.mubr.f32.gmra.mrb[0].mxu0 %v793
        %v1071 = vpop.f32.mrb[0].mxu0
        %v1072 = vadd.f32 %v967, %v1071
        %v1073 = vpop.f32.mrb[0].mxu0
        %1074 = vmatprep.mubr.f32.mxu0 %v798
        %1075 = vmatmul.mubr.f32.gmra.mrb[0].mxu0 %v797
        %v1076 = vpop.f32.mrb[0].mxu0
        %v1077 = vadd.f32 %v972, %v1076
        %v1078 = vpop.f32.mrb[0].mxu0
        %1079 = vdwg.mxu0
        %1080 = vst [vmem:[%s325] sm:$0xff] %v1042
        %1081 = vst [vmem:[%s325 + $0x8] sm:$0xff] %v1047
        %1082 = vst [vmem:[%s325 + $0x10] sm:$0xff] %v1052
        %1083 = vst [vmem:[%s325 + $0x18] sm:$0xff] %v1057
        %1084 = vst [vmem:[%s325 + $0x20] sm:$0xff] %v1062
        %1085 = vst [vmem:[%s325 + $0x28] sm:$0xff] %v1067
        %1086 = vst [vmem:[%s325 + $0x30] sm:$0xff] %v1072
        %1087 = vst [vmem:[%s325 + $0x38] sm:$0xff] %v1077
        %s1088 = sand.u32 %s185, 1
        %s1089 = scalar_lea.sflag [#allocation4], %s1088
        %s1090 = sand.u32 %s185, 1
        %s1091 = smul.addr %s1090, 64
        %s1092 = scalar_lea.vmem [#allocation8], %s1091
        // Predicated region
        $region61: #{tpu_custom_call.1} parent=47 // pred_check
          %p1093 = pneg %p195
        $region62: #{tpu_custom_call.1} parent=47 // pred_check_branch
          %1095 = sbr.rel (%p1093) target = $region64
        $region63: #{tpu_custom_call.1} parent=47 // pred_region
          %s1096 = smul.u32 8, %s25
          %s1098 = ssub.s32 1024, 1024
          %1099 = vsyncadd %s1089, %s1098
          %s1100 = smul.addr %s1096, 128
          %s1101 = scalar_lea.hbm %s7, %s1100
          %s1102 = sshll.u32 %s1092, 4
          %s1103 = int_to_ptr.vmem [resolvable:$true] %s1102
          %1108 = dma.vmem_to_hbm [thread:$0]  %s1103, 1024, %s1101, %s1089, 128, 128, 8
        $region64: #{tpu_custom_call.1} parent=47 // pred_fallthru
          _
      $region48: #{tpu_custom_call.1} parent=5 // pred_fallthru
        _
      %p1109 = scmp.le.s32.totalorder 2, %s20
      // Predicated region
      $region65: #{tpu_custom_call.1} parent=5 // pred_check
        %p1110 = pneg %p1109
      $region66: #{tpu_custom_call.1} parent=5 // pred_check_branch
        %1112 = sbr.rel (%p1110) target = $region68
      $region67: #{tpu_custom_call.1} parent=5 // pred_region
        %s1113 = ssub.s32 %s20, 2
        // Predicated region
        $region69: #{tpu_custom_call.1} parent=67 // pred_check
          %p1114 = pneg %p201
        $region70: #{tpu_custom_call.1} parent=67 // pred_check_branch
          %1116 = sbr.rel (%p1114) target = $region72
        $region71: #{tpu_custom_call.1} parent=67 // pred_region
          %s1117 = sand.u32 %s186, 1
          %s1118 = scalar_lea.sflag [#allocation4], %s1117
          %s1119 = sand.u32 %s186, 1
          %s1120 = smul.addr %s1119, 64
          %s1121 = scalar_lea.vmem [#allocation8], %s1120
          %1122 = dma.done %s1118, 1024
        $region72: #{tpu_custom_call.1} parent=67 // pred_fallthru
          _
      $region68: #{tpu_custom_call.1} parent=5 // pred_fallthru
        _
    $region6: #{tpu_custom_call.1} parent=1 // loop_footer
      %s24 = sadd.s32 1, %s20
    $region7: #{tpu_custom_call.1} parent=1 // loop_footer_branch
      %19 = sbr.rel target = $region3
    $region8: #{tpu_custom_call.1} parent=1 // loop_exit
      _
    %1123 = vsyncpa [#allocation3], 1
    %s1124 = scalar_lea.sflag [#allocation3], 1
    %1125 = vsyncpa %s1124, 1
    %1126 = vsyncpa [#allocation6], 1
    %1127 = vsyncpa [#allocation4], 1
    %s1128 = scalar_lea.sflag [#allocation4], 1
    %1129 = vsyncpa %s1128, 1

</llo_original>
